<compile_context>
chip_gen: v7x
topology: tpu7x:2x2x1
jax: 0.10.0
libtpu: 0.0.40
codegen_flags: <defaults>
</compile_context>

<pallas_src>
import jax
import jax.numpy as jnp
from jax.experimental import pallas as pl
from jax.experimental.pallas import tpu as pltpu


def _round_up(x, m):
    return (x + m - 1) // m * m


def _patch_embed_kernel(x_ref, w_ref, b_ref, o_ref):
    # x_ref: (tm, K) bf16, w_ref: (K, N) bf16, b_ref: (1, N) f32, o_ref: (tm, N).
    # MXU matmul with f32 accumulation; bias add in f32; single cast on store.
    acc = jnp.dot(x_ref[...], w_ref[...], preferred_element_type=jnp.float32)
    o_ref[...] = (acc + b_ref[...]).astype(o_ref.dtype)


def _choose_tile_m(M, K, N, out_itemsize):
    """Pick the M-tile so streamed blocks fit a conservative VMEM budget on all
    TPU generations and the grid has >= 2 steps whenever M allows (v7x 2-TC)."""
    # Streamed, double-buffered bytes per tile row: x (bf16) + out blocks.
    per_row = 2 * K * 2 + 2 * N * out_itemsize
    budget = 24 * 1024 * 1024               # leaves room for resident weight/bias
    cap = max(128, min(1024, (budget // per_row) // 128 * 128))
    if M <= 16:
        return M                             # one full-dim block (always legal)
    half = pl.cdiv(M, 2)                     # aim for >= 2 grid steps
    align = 128 if half >= 128 else 16       # 16 keeps bf16 sublane packing happy
    return min(cap, _round_up(half, align))


def patch_embed_matmul(patches, weight, bias, out_dtype):
    """patches: (M, K) bf16; weight: (K, N) bf16; bias: (1, N) f32 -> (M, N)."""
    M, K = patches.shape
    Kw, N = weight.shape
    assert K == Kw and bias.shape == (1, N)

    out_itemsize = jnp.dtype(out_dtype).itemsize
    tm = _choose_tile_m(M, K, N, out_itemsize)
    grid = (pl.cdiv(M, tm),)

    # Tight, self-documenting VMEM limit: double-buffered x/out blocks plus the
    # pipeline's weight/bias buffers, +25% headroom (never the blanket 48 MiB).
    block_bytes = (2 * tm * K * 2                 # x blocks (bf16)
                   + 2 * tm * N * out_itemsize    # out blocks
                   + 2 * K * N * 2                # weight (bf16) buffers
                   + 2 * N * 4)                   # bias (f32) buffers
    vmem_limit = int(block_bytes * 1.25) + (1 << 20)
    vmem_limit = max(4 * 1024 * 1024, min(vmem_limit, 48 * 1024 * 1024))

    cost = pl.CostEstimate(
        flops=2 * M * K * N,
        transcendentals=0,
        bytes_accessed=(M * K * 2 + K * N * 2 + N * 4 + M * N * out_itemsize),
    )

    return pl.pallas_call(
        _patch_embed_kernel,
        out_shape=jax.ShapeDtypeStruct((M, N), out_dtype),
        grid_spec=pltpu.PrefetchScalarGridSpec(
            num_scalar_prefetch=0,
            grid=grid,
            in_specs=[
                # Streamed along M; the tail block's OOB rows are masked on store.
                pl.BlockSpec((tm, K), lambda i: (i, 0)),
                # Weight + bias: constant index_map -> fetched once, VMEM-resident.
                pl.BlockSpec((K, N), lambda i: (0, 0)),
                pl.BlockSpec((1, N), lambda i: (0, 0)),
            ],
            out_specs=pl.BlockSpec((tm, N), lambda i: (i, 0)),
        ),
        compiler_params=pltpu.CompilerParams(
            dimension_semantics=("parallel",),
            vmem_limit_bytes=vmem_limit,
        ),
        cost_estimate=cost,
    )(patches, weight, bias)


class PatchEmbed:
    """JAX/Pallas port of MAE's PatchEmbed (Conv2d with stride == kernel == patch)."""

    def __init__(self, img_size=224, patch_size=16, in_chans=3, embed_dim=768,
                 key=jax.random.PRNGKey(0), dtype=jnp.float32):
        self.img_size = (img_size, img_size)
        self.patch_size = (patch_size, patch_size)
        self.num_patches = (img_size // patch_size) * (img_size // patch_size)
        self.in_chans = in_chans
        self.embed_dim = embed_dim
        self.dtype = dtype

        k_w, k_b = jax.random.split(key)
        # PyTorch Conv2d init: weight (D, C, ph, pw), bias (D,), U(-1/sqrt(fan_in), ..).
        fan_in = in_chans * patch_size * patch_size
        bound = 1.0 / (fan_in ** 0.5)
        w_conv = jax.random.uniform(
            k_w, (embed_dim, in_chans, patch_size, patch_size),
            minval=-bound, maxval=bound, dtype=jnp.float32)
        self.bias = jax.random.uniform(
            k_b, (embed_dim,), minval=-bound, maxval=bound, dtype=jnp.float32)

        # Flatten the conv weight to (K, D) with K ordered (c, kh, kw) -- the same
        # order the patches are flattened below.  Keep an f32 copy for reference.
        self.weight = w_conv.reshape(embed_dim, fan_in).T             # (K, D) f32
        self.weight_bf16 = self.weight.astype(jnp.bfloat16)           # MXU operand
        self.bias_2d = self.bias.reshape(1, embed_dim).astype(jnp.float32)

        # jit the forward so the bf16 cast + im2col transpose fuse into a single
        # XLA pass and the trailing reshape stays metadata-only.
        self._forward = jax.jit(self._forward_impl)

    def _forward_impl(self, x):
        B, C, H, W = x.shape
        ph, pw = self.patch_size
        nh, nw = H // ph, W // pw

        # TODO(synk): fuse this im2col (cast + transpose) into the kernel's own
        # DMA/grid (per-(b, patch-row) slab with an in-VMEM (c,ph,pw)->K
        # rearrangement riding the XLU) to drop the remaining activation
        # read+write in HBM; kept in XLA for now because the NCHW->patch
        # relayout has a tiny minor dim (pw) that Mosaic lowers poorly.
        xb = x.astype(jnp.bfloat16)                      # cast BEFORE transpose
        patches = xb.reshape(B, C, nh, ph, nw, pw)
        patches = patches.transpose(0, 2, 4, 1, 3, 5)    # (B, nh, nw, C, ph, pw)
        patches = patches.reshape(B * nh * nw, C * ph * pw)

        out = patch_embed_matmul(patches, self.weight_bf16, self.bias_2d,
                                 out_dtype=self.dtype)
        return out.reshape(B, nh * nw, self.embed_dim)

    def __call__(self, x):
        B, C, H, W = x.shape
        assert H == self.img_size[0] and W == self.img_size[1], (
            f"Input image size ({H}*{W}) doesn't match model "
            f"({self.img_size[0]}*{self.img_size[1]}).")
        return self._forward(x)


if __name__ == "__main__":
    key = jax.random.PRNGKey(0)
    k_x, k_p = jax.random.split(key)

    B, C, H, W = 2, 4, 16, 16
    patch, dim = 4, 32

    x = jax.random.normal(k_x, (B, C, H, W), dtype=jnp.float32)
    model = PatchEmbed(img_size=H, patch_size=patch, in_chans=C,
                       embed_dim=dim, key=k_p)

    out = model(x)
    out = jax.block_until_ready(out)

    # Reference check (pure JAX strided-conv equivalent).
    nh, nw = H // patch, W // patch
    patches_ref = x.reshape(B, C, nh, patch, nw, patch).transpose(0, 2, 4, 1, 3, 5)
    patches_ref = patches_ref.reshape(B, nh * nw, C * patch * patch)

    # bf16-consistent reference (same numerics as the kernel's MXU operands).
    p_bf = patches_ref.astype(jnp.bfloat16).astype(jnp.float32)
    w_bf = model.weight.astype(jnp.bfloat16).astype(jnp.float32)
    ref_bf16 = jnp.einsum("bnk,kd->bnd", p_bf, w_bf) + model.bias
    # Full-f32 reference (loose tolerance covers the intentional bf16 input cast).
    ref_f32 = jnp.einsum("bnk,kd->bnd", patches_ref, model.weight) + model.bias

    assert out.shape == (B, model.num_patches, dim), out.shape
    assert jnp.allclose(out, ref_bf16, atol=2e-3, rtol=2e-3)
    assert jnp.allclose(out, ref_f32, atol=5e-2, rtol=5e-2)
    print("KERNEL_OK")
</pallas_src>

<mosaic_0001>
module attributes {stable_mosaic.version = 11 : i64} {
  func.func @_patch_embed_kernel(%arg0: i32, %arg1: memref<16x64xbf16, #tpu.memory_space<vmem>>, %arg2: memref<64x32xbf16, #tpu.memory_space<vmem>>, %arg3: memref<1x32xf32, #tpu.memory_space<vmem>>, %arg4: memref<16x32xf32, #tpu.memory_space<vmem>>) attributes {dimension_semantics = [#tpu.dimension_semantics<parallel>], iteration_bounds = array<i64: 2>, scalar_prefetch = 0 : i64, scratch_operands = 0 : i64, tpu.core_type = #tpu.core_type<tc>, window_params = [{transform_indices = @transform_0, window_bounds = array<i64: 16, 64>}, {pipeline_mode = #tpu.pipeline_mode<synchronous>, transform_indices = @transform_1, window_bounds = array<i64: 64, 32>}, {pipeline_mode = #tpu.pipeline_mode<synchronous>, transform_indices = @transform_2, window_bounds = array<i64: 1, 32>}, {transform_indices = @transform_3, window_bounds = array<i64: 16, 32>}]} {
    %c0 = arith.constant 0 : index
    %c0_0 = arith.constant 0 : index
    %0 = vector.load %arg1[%c0, %c0_0] : memref<16x64xbf16, #tpu.memory_space<vmem>>, vector<16x64xbf16>
    %c0_1 = arith.constant 0 : index
    %c0_2 = arith.constant 0 : index
    %1 = vector.load %arg2[%c0_1, %c0_2] : memref<64x32xbf16, #tpu.memory_space<vmem>>, vector<64x32xbf16>
    %cst = arith.constant dense<0.000000e+00> : vector<16x32xf32>
    %2 = tpu.matmul %0, %1, %cst {dimension_numbers = #tpu.dot_dimension_numbers<[1], [0], [0], [1], [0, 0, 1, 1], [], []>} : vector<16x64xbf16>, vector<64x32xbf16>, vector<16x32xf32> -> vector<16x32xf32>
    %c0_3 = arith.constant 0 : index
    %c0_4 = arith.constant 0 : index
    %3 = vector.load %arg3[%c0_3, %c0_4] : memref<1x32xf32, #tpu.memory_space<vmem>>, vector<1x32xf32>
    %4 = vector.broadcast %3 : vector<1x32xf32> to vector<16x32xf32>
    %5 = arith.addf %2, %4 : vector<16x32xf32>
    %c0_5 = arith.constant 0 : index
    %c0_6 = arith.constant 0 : index
    %6 = vector.load %arg4[%c0_5, %c0_6] : memref<16x32xf32, #tpu.memory_space<vmem>>, vector<16x32xf32>
    tpu.vector_store %arg4[%c0_5, %c0_6], %5 {strides = array<i32>} : memref<16x32xf32, #tpu.memory_space<vmem>>, vector<16x32xf32>,
    return
  }
  func.func @transform_0(%arg0: i32) -> (i32, i32) {
    %c0_i32 = arith.constant 0 : i32
    %c0_i32_0 = arith.constant 0 : i32
    return %arg0, %c0_i32 : i32, i32
  }
  func.func @transform_1(%arg0: i32) -> (i32, i32) {
    %c0_i32 = arith.constant 0 : i32
    %c0_i32_0 = arith.constant 0 : i32
    %c0_i32_1 = arith.constant 0 : i32
    return %c0_i32, %c0_i32_0 : i32, i32
  }
  func.func @transform_2(%arg0: i32) -> (i32, i32) {
    %c0_i32 = arith.constant 0 : i32
    %c0_i32_0 = arith.constant 0 : i32
    %c0_i32_1 = arith.constant 0 : i32
    return %c0_i32, %c0_i32_0 : i32, i32
  }
  func.func @transform_3(%arg0: i32) -> (i32, i32) {
    %c0_i32 = arith.constant 0 : i32
    %c0_i32_0 = arith.constant 0 : i32
    return %arg0, %c0_i32 : i32, i32
  }
}

</mosaic_0001>

<llo_original>
// kernel: _forward_impl.1
$region0: #{_forward_impl.1}
  #allocation0 [shape = 'u32[]', space=smem, size = 0x4, offset = 0x4, fixed_abs, tag = 'smem constant byte address 0x4 - core index']
  #allocation1 [shape = 'u32[144,128]{1,0:T(1,128)}', space=vmem, size = 0x12000, scoped, tag = 'internal scratch']
  %s0 = inlined_call_operand.vmem [shape: bf16[32,64], index: 0, kind: input, shape index: {}]
  %s1 = inlined_call_operand.vmem [shape: bf16[64,32], index: 1, kind: input, shape index: {}]
  %s2 = inlined_call_operand.vmem [shape: f32[1,32], index: 2, kind: input, shape index: {}]
  %s3 = inlined_call_operand.hbm [shape: f32[32,32], index: 3, kind: output, shape index: {}]
  %s4 = sld [smem:[#allocation0]]
  $region45: #{_forward_impl.1} parent=0
    _
  %s6 = ssub.s32 1, %s4
  %s7 = scalar_select 0, %s6, %s4
  $region1: #{_forward_impl.1} parent=0
    #allocation2 [shape = 'u8[16384]{0}', space=vmem, size = 0x4000, scoped, tag = 'output window, operand 0']
    #allocation3 [shape = 's32[2]{0}', space=sflag, size = 0x8, scoped, tag = 'scoped memory for _forward_impl.1']
    %8 = vsyncpa [#allocation3], 0
    %s9 = scalar_lea.sflag [#allocation3], 1
    %10 = vsyncpa %s9, 0
    loop: start=0, step=1, limit=4
    $region2: #{_forward_impl.1} parent=1 // loop_pre_header
      _
    $region3: #{_forward_impl.1} parent=1 // loop_header
      %s12 = sphi 0, %s16
      %p13 = scmp.ge.s32.totalorder %s12, 4
      %s22 = sphi 0, %s24
      %s25 = sphi 0, %s22
      %s26 = sphi 0, %s25
      %s42 = sphi 0, %s26
      %s46 = sphi 0, %s46
      %s48 = sphi 0, %s46
      %s49 = sphi 0, %s48
      %s63 = sphi 0, %s49
      %s67 = sphi 0, %s67
      %s69 = sphi 0, %s67
      %s70 = sphi 0, %s69
      %s84 = sphi 0, %s70
      %s90 = sphi 0, %s92
      %s93 = sphi 0, %s90
      %s94 = sphi 0, %s93
      %s110 = sphi 0, %s94
    $region4: #{_forward_impl.1} parent=1 // loop_header_branch
      %15 = sbr.rel (%p13) target = $region8
    $region5: #{_forward_impl.1} parent=1 // loop_body
      %s17 = ssub.s32 %s12, 1
      %s18 = ssub.s32 %s12, 2
      %s19 = sadd.s32 %s12, 1
      %s20 = ssub.s32 %s12, %s19
      %p21 = scmp.eq.s32.totalorder %s20, 0
      %s23 = sadd.s32 %s22, 1
      %s24 = scalar_select %p21, %s22, %s23
      %p27 = pneg %p21
      %p28 = scmp.eq.s32.totalorder %s12, 1
      %p29 = por %p27, %p28
      %p30 = scmp.ne.s32.totalorder %s22, %s25
      %p31 = scmp.eq.s32.totalorder %s12, 0
      %p32 = por %p30, %p31
      %p33 = scmp.ne.s32.totalorder %s22, %s25
      %p34 = scmp.eq.s32.totalorder %s17, 1
      %p35 = por %p33, %p34
      %p36 = scmp.ne.s32.totalorder %s25, %s26
      %p37 = scmp.eq.s32.totalorder %s17, 0
      %p38 = por %p36, %p37
      %p39 = scmp.ne.s32.totalorder %s25, %s26
      %p40 = scmp.eq.s32.totalorder %s18, 1
      %p41 = por %p39, %p40
      %p43 = scmp.ne.s32.totalorder %s26, %s42
      %p44 = scmp.eq.s32.totalorder %s18, 0
      %p45 = por %p43, %p44
      %s47 = sadd.s32 %s46, 1
      %p50 = scmp.eq.s32.totalorder %s12, 1
      %p51 = scmp.ne.s32.totalorder %s46, %s48
      %p52 = scmp.eq.s32.totalorder %s12, 0
      %p53 = por %p51, %p52
      %p54 = scmp.ne.s32.totalorder %s46, %s48
      %p55 = scmp.eq.s32.totalorder %s17, 1
      %p56 = por %p54, %p55
      %p57 = scmp.ne.s32.totalorder %s48, %s49
      %p58 = scmp.eq.s32.totalorder %s17, 0
      %p59 = por %p57, %p58
      %p60 = scmp.ne.s32.totalorder %s48, %s49
      %p61 = scmp.eq.s32.totalorder %s18, 1
      %p62 = por %p60, %p61
      %p64 = scmp.ne.s32.totalorder %s49, %s63
      %p65 = scmp.eq.s32.totalorder %s18, 0
      %p66 = por %p64, %p65
      %s68 = sadd.s32 %s67, 1
      %p71 = scmp.eq.s32.totalorder %s12, 1
      %p72 = scmp.ne.s32.totalorder %s67, %s69
      %p73 = scmp.eq.s32.totalorder %s12, 0
      %p74 = por %p72, %p73
      %p75 = scmp.ne.s32.totalorder %s67, %s69
      %p76 = scmp.eq.s32.totalorder %s17, 1
      %p77 = por %p75, %p76
      %p78 = scmp.ne.s32.totalorder %s69, %s70
      %p79 = scmp.eq.s32.totalorder %s17, 0
      %p80 = por %p78, %p79
      %p81 = scmp.ne.s32.totalorder %s69, %s70
      %p82 = scmp.eq.s32.totalorder %s18, 1
      %p83 = por %p81, %p82
      %p85 = scmp.ne.s32.totalorder %s70, %s84
      %p86 = scmp.eq.s32.totalorder %s18, 0
      %p87 = por %p85, %p86
      %s88 = ssub.s32 %s12, %s19
      %p89 = scmp.eq.s32.totalorder %s88, 0
      %s91 = sadd.s32 %s90, 1
      %s92 = scalar_select %p89, %s90, %s91
      %p95 = pneg %p89
      %p96 = scmp.eq.s32.totalorder %s12, 1
      %p97 = por %p95, %p96
      %p98 = scmp.ne.s32.totalorder %s90, %s93
      %p99 = scmp.eq.s32.totalorder %s12, 0
      %p100 = por %p98, %p99
      %p101 = scmp.ne.s32.totalorder %s90, %s93
      %p102 = scmp.eq.s32.totalorder %s17, 1
      %p103 = por %p101, %p102
      %p104 = scmp.ne.s32.totalorder %s93, %s94
      %p105 = scmp.eq.s32.totalorder %s17, 0
      %p106 = por %p104, %p105
      %p107 = scmp.ne.s32.totalorder %s93, %s94
      %p108 = scmp.eq.s32.totalorder %s18, 1
      %p109 = por %p107, %p108
      %p111 = scmp.ne.s32.totalorder %s94, %s110
      %p112 = scmp.eq.s32.totalorder %s18, 0
      %p113 = por %p111, %p112
      %p114 = scmp.le.s32.totalorder 1, %s12
      %p115 = scmp.lt.s32.totalorder %s12, 3
      %p116 = pnand %p114, %p115
      %p117 = pneg %p116
      // Predicated region
      $region9: #{_forward_impl.1} parent=5 // pred_check
        _
      $region10: #{_forward_impl.1} parent=5 // pred_check_branch
        %119 = sbr.rel (%p116) target = $region12
      $region11: #{_forward_impl.1} parent=5 // pred_region
        %s120 = ssub.s32 %s12, 1
        // Predicated region
        $region13: #{_forward_impl.1} parent=11 // pred_check
          %p121 = pneg %p59
        $region14: #{_forward_impl.1} parent=11 // pred_check_branch
          %123 = sbr.rel (%p121) target = $region16
        $region15: #{_forward_impl.1} parent=11 // pred_region
          _
        $region16: #{_forward_impl.1} parent=11 // pred_fallthru
          _
        // Predicated region
        $region17: #{_forward_impl.1} parent=11 // pred_check
          %p124 = pneg %p80
        $region18: #{_forward_impl.1} parent=11 // pred_check_branch
          %126 = sbr.rel (%p124) target = $region20
        $region19: #{_forward_impl.1} parent=11 // pred_region
          _
        $region20: #{_forward_impl.1} parent=11 // pred_fallthru
          _
      $region12: #{_forward_impl.1} parent=5 // pred_fallthru
        _
      %p127 = scmp.lt.s32.totalorder %s12, 2
      // Predicated region
      $region21: #{_forward_impl.1} parent=5 // pred_check
        %p128 = pneg %p127
      $region22: #{_forward_impl.1} parent=5 // pred_check_branch
        %130 = sbr.rel (%p128) target = $region24
      $region23: #{_forward_impl.1} parent=5 // pred_region
        // Predicated region
        $region25: #{_forward_impl.1} parent=23 // pred_check
          %p131 = pneg %p32
        $region26: #{_forward_impl.1} parent=23 // pred_check_branch
          %133 = sbr.rel (%p131) target = $region28
        $region27: #{_forward_impl.1} parent=23 // pred_region
          %s134 = smul.u32 2, %s12
          %p135 = scmp.lt.s32.totalorder %s134, 3
          %s136 = scalar_select %p135, %s134, 3
          %s137 = smul.addr %s136, 4
          %s138 = scalar_lea.vmem %s0, %s137
          %s139 = smul.u32 2, %s12
        $region28: #{_forward_impl.1} parent=23 // pred_fallthru
          _
      $region24: #{_forward_impl.1} parent=5 // pred_fallthru
        _
      %p140 = scmp.le.s32.totalorder 1, %s12
      %p141 = scmp.lt.s32.totalorder %s12, 3
      %p142 = pnand %p140, %p141
      %p143 = pneg %p142
      // Predicated region
      $region29: #{_forward_impl.1} parent=5 // pred_check
        _
      $region30: #{_forward_impl.1} parent=5 // pred_check_branch
        %145 = sbr.rel (%p142) target = $region32
      $region31: #{_forward_impl.1} parent=5 // pred_region
        %s146 = ssub.s32 %s12, 1
        %s147 = smul.u32 2, %s17
        %p148 = scmp.lt.s32.totalorder %s147, 3
        %s149 = scalar_select %p148, %s147, 3
        %s150 = smul.addr %s149, 4
        %s151 = scalar_lea.vmem %s0, %s150
        %p152 = pneg %p38
        %p153 = pneg %p35
        %p154 = pneg %p59
        %p155 = pneg %p56
        %p156 = pneg %p80
        %p157 = pneg %p77
        %p158 = pneg %p106
        %p159 = pneg %p103
        %s160 = sand.u32 %s93, 1
        %s161 = scalar_lea.sflag [#allocation3], %s160
        %s162 = sand.u32 %s93, 1
        %s163 = smul.addr %s162, 16
        %s164 = scalar_lea.vmem [#allocation2], %s163
        %s165 = smul.u32 2, %s17
        %p166 = scmp.lt.s32.totalorder %s165, 3
        %s167 = scalar_select %p166, %s165, 3
        %s168 = smul.addr %s167, 4
        %s169 = scalar_lea.vmem %s0, %s168
        %s170 = smul.u32 2, %s17
        %s171 = smul.u32 2, %s17
        %v173 = vld [vmem:[%s169] sm:$0xf]
        %v174 = vld [vmem:[%s169 + $0x4] sm:$0xf]
        %v175 = vld [vmem:[%s1] sm:$0xf]
        %v176 = vld [vmem:[%s1 + $0x4] sm:$0xf]
        %v177 = vld [vmem:[%s1 + $0x8] sm:$0xf]
        %v178 = vld [vmem:[%s1 + $0xc] sm:$0xf]
        %v179 = vld [vmem:[%s1 + $0x10] sm:$0xf]
        %v180 = vld [vmem:[%s1 + $0x14] sm:$0xf]
        %v181 = vld [vmem:[%s1 + $0x18] sm:$0xf]
        %v182 = vld [vmem:[%s1 + $0x1c] sm:$0xf]
        %v183 = vld [vmem:[%s2] sm:$0x1]
        %v185 = vlaneseq
        %v186 = vshrl.u32 %v185, 7
        %v187 = vsub.s32 0, %v186
        %v188 = vrot.slane %v183, %v187
        %v192 = vunpack.c.l.b16 %v173
        %v193 = vunpack.c.l.b16 %v174
        %v194 = vpack.c.b16 %v193, %v192
        %v203 = vunpack.c.l.b16 %v175
        %v204 = vunpack.c.l.b16 %v176
        %v205 = vunpack.c.l.b16 %v177
        %v206 = vunpack.c.l.b16 %v178
        %v207 = vunpack.c.l.b16 %v179
        %v208 = vunpack.c.l.b16 %v180
        %v209 = vunpack.c.l.b16 %v181
        %v210 = vunpack.c.l.b16 %v182
        %v211 = vpack.c.b16 %v204, %v203
        %v212 = vpack.c.b16 %v206, %v205
        %v213 = vpack.c.b16 %v208, %v207
        %v214 = vpack.c.b16 %v210, %v209
        %vm219 = vcmask 523264
        %v221 = vsel %vm219, %v194, 0
        %223 = vmatprep.subr.bf16.mxu0 0
        %224 = vmatpush1.bf16.msra.mxu0 %v211
        %225 = vmatprep.subr.bf16.mxu0 0
        %226 = vmatpush1.bf16.msra.mxu0 %v212
        %227 = vmatprep.subr.bf16.mxu0 0
        %228 = vmatpush1.bf16.msra.mxu0 %v213
        %229 = vmatprep.subr.bf16.mxu0 0
        %230 = vmatpush1.bf16.msra.mxu0 %v214
        %231 = vmatprep.subr.bf16.mxu0 0
        %232 = vmatpush1.bf16.msra.mxu0 0
        %233 = vmatprep.subr.bf16.mxu0 0
        %234 = vmatpush1.bf16.msra.mxu0 0
        %235 = vmatprep.subr.bf16.mxu0 0
        %236 = vmatpush1.bf16.msra.mxu0 0
        %237 = vmatprep.subr.bf16.mxu0 0
        %238 = vmatpush1.bf16.msra.mxu0 0
        %239 = vmatprep.subr.bf16.mxu0 0
        %240 = vmatpush1.bf16.msra.mxu0 0
        %241 = vmatprep.subr.bf16.mxu0 0
        %242 = vmatpush1.bf16.msra.mxu0 0
        %243 = vmatprep.subr.bf16.mxu0 0
        %244 = vmatpush1.bf16.msra.mxu0 0
        %245 = vmatprep.subr.bf16.mxu0 0
        %246 = vmatpush1.bf16.msra.mxu0 0
        %247 = vmatprep.subr.bf16.mxu0 0
        %248 = vmatpush1.bf16.msra.mxu0 0
        %249 = vmatprep.subr.bf16.mxu0 0
        %250 = vmatpush1.bf16.msra.mxu0 0
        %251 = vmatprep.subr.bf16.mxu0 0
        %252 = vmatpush1.bf16.msra.mxu0 0
        %253 = vmatprep.subr.bf16.mxu0 0
        %254 = vmatpush1.bf16.msra.mxu0 0
        %255 = vmatprep.mubr.bf16.mxu0 0
        %256 = vmatmul.mubr.bf16.gmra.mrb[0].mxu0 %v221
        %v257 = vpop.f32.mrb[0].mxu0
        %v258 = vadd.f32 %v188, %v257
        %v259 = vpop.f32.mrb[0].mxu0
        %v260 = vpop.f32.mrb[0].mxu0
        %v261 = vadd.f32 %v188, %v260
        %v262 = vpop.f32.mrb[0].mxu0
        %263 = vdwg.mxu0
        %vm264 = vcmask 261120
        %265 = vst.msk [vmem:[%s164] sm:$0xff] %vm264, %v258
        %266 = vst.msk [vmem:[%s164 + $0x8] sm:$0xff] %vm264, %v261
        %s267 = sand.u32 %s93, 1
        %s268 = scalar_lea.sflag [#allocation3], %s267
        %s269 = sand.u32 %s93, 1
        %s270 = smul.addr %s269, 16
        %s271 = scalar_lea.vmem [#allocation2], %s270
        // Predicated region
        $region33: #{_forward_impl.1} parent=31 // pred_check
          %p272 = pneg %p103
        $region34: #{_forward_impl.1} parent=31 // pred_check_branch
          %274 = sbr.rel (%p272) target = $region36
        $region35: #{_forward_impl.1} parent=31 // pred_region
          %s275 = smul.u32 2, %s17
          %s277 = ssub.s32 256, 256
          %278 = vsyncadd %s268, %s277
          %s279 = smul.addr %s275, 128
          %s280 = scalar_lea.hbm %s3, %s279
          %s281 = sshll.u32 %s271, 4
          %s282 = int_to_ptr.vmem [resolvable:$true] %s281
          %287 = dma.vmem_to_hbm [thread:$0]  %s282, 256, %s280, %s268, 128, 128, 8
        $region36: #{_forward_impl.1} parent=31 // pred_fallthru
          _
      $region32: #{_forward_impl.1} parent=5 // pred_fallthru
        _
      %p288 = scmp.le.s32.totalorder 2, %s12
      // Predicated region
      $region37: #{_forward_impl.1} parent=5 // pred_check
        %p289 = pneg %p288
      $region38: #{_forward_impl.1} parent=5 // pred_check_branch
        %291 = sbr.rel (%p289) target = $region40
      $region39: #{_forward_impl.1} parent=5 // pred_region
        %s292 = ssub.s32 %s12, 2
        // Predicated region
        $region41: #{_forward_impl.1} parent=39 // pred_check
          %p293 = pneg %p109
        $region42: #{_forward_impl.1} parent=39 // pred_check_branch
          %295 = sbr.rel (%p293) target = $region44
        $region43: #{_forward_impl.1} parent=39 // pred_region
          %s296 = sand.u32 %s94, 1
          %s297 = scalar_lea.sflag [#allocation3], %s296
          %s298 = sand.u32 %s94, 1
          %s299 = smul.addr %s298, 16
          %s300 = scalar_lea.vmem [#allocation2], %s299
          %301 = dma.done %s297, 256
        $region44: #{_forward_impl.1} parent=39 // pred_fallthru
          _
      $region40: #{_forward_impl.1} parent=5 // pred_fallthru
        _
    $region6: #{_forward_impl.1} parent=1 // loop_footer
      %s16 = sadd.s32 1, %s12
    $region7: #{_forward_impl.1} parent=1 // loop_footer_branch
      %11 = sbr.rel target = $region3
    $region8: #{_forward_impl.1} parent=1 // loop_exit
      _
    %302 = vsyncpa [#allocation3], 1
    %s303 = scalar_lea.sflag [#allocation3], 1
    %304 = vsyncpa %s303, 1

</llo_original>
